<compile_context>
chip_gen: v6e
topology: v6e:2x2x1
jax: 0.10.0
libtpu: 0.0.40
codegen_flags: <defaults>
</compile_context>

<pallas_src>
import functools
import math

import jax
import jax.numpy as jnp
from jax.experimental import pallas as pl
from jax.experimental.pallas import tpu as pltpu

TILE = 128

# scaled stand-ins for (2048, 1024, 512, 256) / 256 so the script stays small
ENCODER_CHANNELS = (128, 64, 32, 16)   # deepest first
DECODER_CHANNELS = 32


def _rup(x, m):
    return (x + m - 1) // m * m


# --------------------------------------------------------------------------
# Pallas kernels: fused  out = [relu]( A @ W + bias [+ residual] )
# A/W tiles are bf16 (MXU), accumulation + epilogue in f32.
# The full K dimension is a single block, so the output is produced in one
# shot per (i, j) tile -- no accumulator scratch, no init/finalize phases.
# --------------------------------------------------------------------------
def _gemm_bias_kernel(a_ref, b_ref, bias_ref, o_ref, *, relu):
    acc = jnp.dot(a_ref[...], b_ref[...], preferred_element_type=jnp.float32)
    out = acc + bias_ref[...]
    if relu:
        out = jnp.maximum(out, 0.0)
    o_ref[...] = out.astype(o_ref.dtype)


def _gemm_bias_res_kernel(a_ref, b_ref, bias_ref, res_ref, o_ref, *, relu):
    acc = jnp.dot(a_ref[...], b_ref[...], preferred_element_type=jnp.float32)
    out = acc + bias_ref[...] + res_ref[...]
    if relu:
        out = jnp.maximum(out, 0.0)
    o_ref[...] = out.astype(o_ref.dtype)


def fused_matmul(a, w, bias, residual=None, relu=False):
    """a: (M, K) f32, w: (K, N) f32, bias: (N,), residual: (M, N) or None.

    Returns (M, N) f32.  A and W are cast to bf16 for the MXU; the epilogue
    (bias + residual + ReLU) stays in f32.
    """
    M, K = a.shape
    Kw, N = w.shape
    assert Kw == K

    # M blocking: only pad M when it is not already a clean multiple.
    if M % TILE == 0:
        Mp, TM = M, TILE
    elif M < TILE:
        Mp = _rup(M, 8)
        TM = Mp
    else:
        Mp = _rup(M, TILE)
        TM = TILE

    # N blocking: single full-dim block unless N is a clean multiple of TILE.
    TN = TILE if (N % TILE == 0) else N

    a_bf = a.astype(jnp.bfloat16)
    if Mp != M:
        a_bf = jnp.pad(a_bf, ((0, Mp - M), (0, 0)))
    w_bf = w.astype(jnp.bfloat16)
    b2 = bias.reshape(1, N).astype(jnp.float32)

    grid = (Mp // TM, N // TN)

    in_specs = [
        pl.BlockSpec((TM, K), lambda i, j: (i, 0)),    # A  (bf16, full K)
        pl.BlockSpec((K, TN), lambda i, j: (0, j)),    # W  (bf16, full K)
        pl.BlockSpec((1, TN), lambda i, j: (0, j)),    # bias (f32)
    ]
    args = [a_bf, w_bf, b2]

    if residual is not None:
        r = residual.astype(jnp.float32)
        if Mp != M:
            r = jnp.pad(r, ((0, Mp - M), (0, 0)))
        in_specs.append(pl.BlockSpec((TM, TN), lambda i, j: (i, j)))
        args.append(r)
        kernel = functools.partial(_gemm_bias_res_kernel, relu=relu)
    else:
        kernel = functools.partial(_gemm_bias_kernel, relu=relu)

    out = pl.pallas_call(
        kernel,
        out_shape=jax.ShapeDtypeStruct((Mp, N), jnp.float32),
        grid_spec=pltpu.PrefetchScalarGridSpec(
            num_scalar_prefetch=0,
            grid=grid,
            in_specs=in_specs,
            out_specs=pl.BlockSpec((TM, TN), lambda i, j: (i, j)),
        ),
        compiler_params=pltpu.CompilerParams(
            dimension_semantics=("parallel", "parallel")),
    )(*args)

    if Mp != M:
        out = out[:M]
    return out


# --------------------------------------------------------------------------
# Convolution = im2col (glue, plain JAX) + Pallas fused GEMM.
# 1x1 stride-1 convs skip im2col entirely (pure reshape).
# --------------------------------------------------------------------------
def _im2col(x, kh, kw, stride, pad):
    # x: NHWC
    x = jnp.pad(x, ((0, 0), (pad, pad), (pad, pad), (0, 0)))
    n, h, w, c = x.shape
    oh = (h - kh) // stride + 1
    ow = (w - kw) // stride + 1
    cols = []
    for i in range(kh):
        for j in range(kw):
            cols.append(x[:, i:i + stride * oh:stride, j:j + stride * ow:stride, :])
    patches = jnp.stack(cols, axis=3)                   # (n, oh, ow, kh*kw, c)
    return patches.reshape(n * oh * ow, kh * kw * c), (n, oh, ow)


def conv2d(x, w, b, stride=1, pad=0, relu=False, residual=None):
    """x: NHWC, w: (cout, cin, kh, kw) [PyTorch layout], b: (cout,)."""
    cout, cin, kh, kw = w.shape
    if kh == 1 and kw == 1 and stride == 1 and pad == 0:
        n, h, wd, c = x.shape
        oh, ow = h, wd
        a = x.reshape(n * oh * ow, c)                   # no im2col needed
        w2d = w.reshape(cout, cin).T                    # (cin, cout)
    else:
        a, (n, oh, ow) = _im2col(x, kh, kw, stride, pad)
        w2d = jnp.transpose(w, (2, 3, 1, 0)).reshape(kh * kw * cin, cout)
    res2d = None if residual is None else residual.reshape(n * oh * ow, cout)
    y = fused_matmul(a, w2d, b, residual=res2d, relu=relu)
    return y.reshape(n, oh, ow, cout)


def _upsample2x(x):
    # nearest 2x; see TODO(synk) above about kernel-fusing this at real scale
    n, h, w, c = x.shape
    x = jnp.broadcast_to(x[:, :, None, :, None, :], (n, h, 2, w, 2, c))
    return x.reshape(n, 2 * h, 2 * w, c)


# --------------------------------------------------------------------------
# Deterministic parameter construction (synthetic; no checkpoint load)
# --------------------------------------------------------------------------
def _conv_params(key, cout, cin, kh, kw):
    k1, k2 = jax.random.split(key)
    bound = 1.0 / math.sqrt(cin * kh * kw)
    w = jax.random.uniform(k1, (cout, cin, kh, kw), jnp.float32, -bound, bound)
    b = jax.random.uniform(k2, (cout,), jnp.float32, -bound, bound)
    return w, b


def init_params(key):
    keys = jax.random.split(key, 10)
    c4, c3, c2, c1 = ENCODER_CHANNELS
    p = {}
    # encoder (simplified ResNet50-FCN backbone: stem + 4 strided stages)
    p["stem"] = _conv_params(keys[0], 8, 3, 3, 3)
    p["stage1"] = _conv_params(keys[1], c1, 8, 3, 3)
    p["stage2"] = _conv_params(keys[2], c2, c1, 3, 3)
    p["stage3"] = _conv_params(keys[3], c3, c2, 3, 3)
    p["stage4"] = _conv_params(keys[4], c4, c3, 3, 3)
    # decoder (SimpleDecoder): lateral 1x1 convs + 3x3 smoothing
    p["lat4"] = _conv_params(keys[5], DECODER_CHANNELS, c4, 1, 1)
    p["lat3"] = _conv_params(keys[6], DECODER_CHANNELS, c3, 1, 1)
    p["lat2"] = _conv_params(keys[7], DECODER_CHANNELS, c2, 1, 1)
    p["lat1"] = _conv_params(keys[8], DECODER_CHANNELS, c1, 1, 1)
    p["smooth"] = _conv_params(keys[9], DECODER_CHANNELS, DECODER_CHANNELS, 3, 3)
    return p


# --------------------------------------------------------------------------
# Model forward
# --------------------------------------------------------------------------
def encoder_forward(p, x):
    h = conv2d(x, *p["stem"], stride=2, pad=1, relu=True)       # /2
    x1 = conv2d(h, *p["stage1"], stride=2, pad=1, relu=True)    # /4,  c1
    x2 = conv2d(x1, *p["stage2"], stride=2, pad=1, relu=True)   # /8,  c2
    x3 = conv2d(x2, *p["stage3"], stride=2, pad=1, relu=True)   # /16, c3
    x4 = conv2d(x3, *p["stage4"], stride=2, pad=1, relu=True)   # /32, c4
    return (x4, x3, x2, x1)   # deepest first -> matches encoder_channels order


def decoder_forward(p, x4, x3, x2, x1):
    d = conv2d(x4, *p["lat4"], stride=1, pad=0, relu=False)
    d = conv2d(x3, *p["lat3"], stride=1, pad=0, relu=False, residual=_upsample2x(d))
    d = conv2d(x2, *p["lat2"], stride=1, pad=0, relu=False, residual=_upsample2x(d))
    d = conv2d(x1, *p["lat1"], stride=1, pad=0, relu=False, residual=_upsample2x(d))
    d = conv2d(d, *p["smooth"], stride=1, pad=1, relu=True)
    return d


def transformer_model_forward(p, x_nchw):
    """Reproduces: xn = encoder(x); x = decoder(*xn); return (x, xn)."""
    x = jnp.transpose(x_nchw, (0, 2, 3, 1))           # NCHW -> NHWC
    xn = encoder_forward(p, x)
    d = decoder_forward(p, *xn)
    d_nchw = jnp.transpose(d, (0, 3, 1, 2))           # back to NCHW
    xn_nchw = tuple(jnp.transpose(f, (0, 3, 1, 2)) for f in xn)
    return d_nchw, xn_nchw


if __name__ == "__main__":
    key = jax.random.PRNGKey(0)
    pkey, xkey, ckey = jax.random.split(key, 3)
    params = init_params(pkey)

    # input: NCHW, batch=2, 3 channels, 32x32 spatial
    x = jax.random.normal(xkey, (2, 3, 32, 32), jnp.float32)

    # quick sanity check of the Pallas GEMM kernel (bf16 operands, f32 acc)
    a = jax.random.normal(ckey, (37, 91), jnp.float32)
    w = jax.random.normal(jax.random.fold_in(ckey, 1), (91, 45), jnp.float32)
    b = jax.random.normal(jax.random.fold_in(ckey, 2), (45,), jnp.float32)
    r = jax.random.normal(jax.random.fold_in(ckey, 3), (37, 45), jnp.float32)
    ref_mm = jnp.dot(a.astype(jnp.bfloat16), w.astype(jnp.bfloat16),
                     preferred_element_type=jnp.float32)
    ref1 = jnp.maximum(ref_mm + b, 0.0)
    got1 = fused_matmul(a, w, b, relu=True)
    assert jnp.allclose(got1, ref1, atol=1e-2, rtol=1e-2), "fused_matmul mismatch"
    ref2 = ref_mm + b + r
    got2 = fused_matmul(a, w, b, residual=r, relu=False)
    assert jnp.allclose(got2, ref2, atol=1e-2, rtol=1e-2), "residual mismatch"

    fwd = jax.jit(transformer_model_forward)
    out, feats = fwd(params, x)
    jax.block_until_ready(out)
    for f in feats:
        jax.block_until_ready(f)

    assert out.shape == (2, DECODER_CHANNELS, 8, 8)
    assert tuple(f.shape[1] for f in feats) == ENCODER_CHANNELS

    print("KERNEL_OK")
</pallas_src>

<mosaic_0001>
module attributes {stable_mosaic.version = 11 : i64} {
  func.func @_gemm_bias_kernel(%arg0: i32, %arg1: i32, %arg2: memref<40x91xbf16, #tpu.memory_space<vmem>>, %arg3: memref<91x45xbf16, #tpu.memory_space<vmem>>, %arg4: memref<1x45xf32, #tpu.memory_space<vmem>>, %arg5: memref<40x45xf32, #tpu.memory_space<vmem>>) attributes {dimension_semantics = [#tpu.dimension_semantics<parallel>, #tpu.dimension_semantics<parallel>], iteration_bounds = array<i64: 1, 1>, scalar_prefetch = 0 : i64, scratch_operands = 0 : i64, tpu.core_type = #tpu.core_type<tc>, window_params = [{transform_indices = @transform_0, window_bounds = array<i64: 40, 91>}, {transform_indices = @transform_1, window_bounds = array<i64: 91, 45>}, {transform_indices = @transform_2, window_bounds = array<i64: 1, 45>}, {transform_indices = @transform_3, window_bounds = array<i64: 40, 45>}]} {
    %c0 = arith.constant 0 : index
    %c0_0 = arith.constant 0 : index
    %0 = vector.load %arg2[%c0, %c0_0] : memref<40x91xbf16, #tpu.memory_space<vmem>>, vector<40x91xbf16>
    %c0_1 = arith.constant 0 : index
    %c0_2 = arith.constant 0 : index
    %1 = vector.load %arg3[%c0_1, %c0_2] : memref<91x45xbf16, #tpu.memory_space<vmem>>, vector<91x45xbf16>
    %cst = arith.constant dense<0.000000e+00> : vector<40x45xf32>
    %2 = tpu.matmul %0, %1, %cst {dimension_numbers = #tpu.dot_dimension_numbers<[1], [0], [0], [1], [0, 0, 1, 1], [], []>} : vector<40x91xbf16>, vector<91x45xbf16>, vector<40x45xf32> -> vector<40x45xf32>
    %c0_3 = arith.constant 0 : index
    %c0_4 = arith.constant 0 : index
    %3 = vector.load %arg4[%c0_3, %c0_4] : memref<1x45xf32, #tpu.memory_space<vmem>>, vector<1x45xf32>
    %4 = vector.broadcast %3 : vector<1x45xf32> to vector<40x45xf32>
    %5 = arith.addf %2, %4 : vector<40x45xf32>
    %cst_5 = arith.constant 0.000000e+00 : f32
    %6 = vector.broadcast %cst_5 : f32 to vector<40x45xf32>
    %7 = arith.maximumf %5, %6 : vector<40x45xf32>
    %c0_6 = arith.constant 0 : index
    %c0_7 = arith.constant 0 : index
    %8 = vector.load %arg5[%c0_6, %c0_7] : memref<40x45xf32, #tpu.memory_space<vmem>>, vector<40x45xf32>
    tpu.vector_store %arg5[%c0_6, %c0_7], %7 {strides = array<i32>} : memref<40x45xf32, #tpu.memory_space<vmem>>, vector<40x45xf32>,
    return
  }
  func.func @transform_0(%arg0: i32, %arg1: i32) -> (i32, i32) {
    %c0_i32 = arith.constant 0 : i32
    %c0_i32_0 = arith.constant 0 : i32
    return %arg0, %c0_i32 : i32, i32
  }
  func.func @transform_1(%arg0: i32, %arg1: i32) -> (i32, i32) {
    %c0_i32 = arith.constant 0 : i32
    %c0_i32_0 = arith.constant 0 : i32
    return %c0_i32, %arg1 : i32, i32
  }
  func.func @transform_2(%arg0: i32, %arg1: i32) -> (i32, i32) {
    %c0_i32 = arith.constant 0 : i32
    %c0_i32_0 = arith.constant 0 : i32
    return %c0_i32, %arg1 : i32, i32
  }
  func.func @transform_3(%arg0: i32, %arg1: i32) -> (i32, i32) {
    %c0_i32 = arith.constant 0 : i32
    return %arg0, %arg1 : i32, i32
  }
}

</mosaic_0001>

<llo_original>
// kernel: tpu_custom_call.1
$region0: #{tpu_custom_call.1}
  #allocation0 [shape = 'u32[]', space=smem, size = 0x4, offset = 0x4, fixed_abs, tag = 'smem constant byte address 0x4 - core index']
  #allocation1 [shape = 'u32[144,128]{1,0:T(1,128)}', space=vmem, size = 0x12000, scoped, tag = 'internal scratch']
  %s0 = inlined_call_operand.vmem [shape: bf16[40,91], index: 0, kind: input, shape index: {}]
  %s1 = inlined_call_operand.vmem [shape: bf16[91,45], index: 1, kind: input, shape index: {}]
  %s2 = inlined_call_operand.vmem [shape: f32[1,45], index: 2, kind: input, shape index: {}]
  %s3 = inlined_call_operand.hbm [shape: f32[40,45], index: 3, kind: output, shape index: {}]
  %s4 = sld [smem:[#allocation0]]
  $region22: #{tpu_custom_call.1} parent=0
    _
  %s6 = ssub.s32 1, %s4
  %s7 = scalar_select 0, %s6, %s4
  $region1: #{tpu_custom_call.1} parent=0
    #allocation2 [shape = 'u8[20480]{0}', space=vmem, size = 0x5000, scoped, tag = 'output window, operand 0, single buffered']
    #allocation3 [shape = 's32[1]{0}', space=sflag, size = 0x4, scoped, tag = 'scoped memory for tpu_custom_call.1']
    %8 = vsyncpa [#allocation3], 0
    // Predicated region
    $region2: #{tpu_custom_call.1} parent=1 // pred_check
      _
    $region3: #{tpu_custom_call.1} parent=1 // pred_check_branch
      %10 = sbr.rel (0) target = $region5
    $region4: #{tpu_custom_call.1} parent=1 // pred_region
      _
    $region5: #{tpu_custom_call.1} parent=1 // pred_fallthru
      _
    // Predicated region
    $region6: #{tpu_custom_call.1} parent=1 // pred_check
      _
    $region7: #{tpu_custom_call.1} parent=1 // pred_check_branch
      %12 = sbr.rel (0) target = $region9
    $region8: #{tpu_custom_call.1} parent=1 // pred_region
      _
    $region9: #{tpu_custom_call.1} parent=1 // pred_fallthru
      _
    // Predicated region
    $region10: #{tpu_custom_call.1} parent=1 // pred_check
      _
    $region11: #{tpu_custom_call.1} parent=1 // pred_check_branch
      %14 = sbr.rel (0) target = $region13
    $region12: #{tpu_custom_call.1} parent=1 // pred_region
      _
    $region13: #{tpu_custom_call.1} parent=1 // pred_fallthru
      _
    %v16 = vld [vmem:[%s0] sm:$0xf]
    %v17 = vld [vmem:[%s0 + $0x4] sm:$0xf]
    %v18 = vld [vmem:[%s0 + $0x8] sm:$0xf]
    %v19 = vld [vmem:[%s0 + $0xc] sm:$0xf]
    %v20 = vld [vmem:[%s0 + $0x10] sm:$0xf]
    %v21 = vld [vmem:[%s1] sm:$0xf]
    %v22 = vld [vmem:[%s1 + $0x4] sm:$0xf]
    %v23 = vld [vmem:[%s1 + $0x8] sm:$0xf]
    %v24 = vld [vmem:[%s1 + $0xc] sm:$0xf]
    %v25 = vld [vmem:[%s1 + $0x10] sm:$0xf]
    %v26 = vld [vmem:[%s1 + $0x14] sm:$0xf]
    %v27 = vld [vmem:[%s1 + $0x18] sm:$0xf]
    %v28 = vld [vmem:[%s1 + $0x1c] sm:$0xf]
    %v29 = vld [vmem:[%s1 + $0x20] sm:$0xf]
    %v30 = vld [vmem:[%s1 + $0x24] sm:$0xf]
    %v31 = vld [vmem:[%s1 + $0x28] sm:$0xf]
    %v32 = vld [vmem:[%s1 + $0x2c] sm:$0x3]
    %v33 = vld [vmem:[%s2] sm:$0x1]
    %v35 = vlaneseq
    %v36 = vshrl.u32 %v35, 7
    %v37 = vsub.s32 0, %v36
    %v38 = vrot.slane %v33, %v37
    %v45 = vunpack.c.l.b16 %v16
    %v46 = vunpack.c.l.b16 %v17
    %v47 = vunpack.c.l.b16 %v18
    %v48 = vunpack.c.l.b16 %v19
    %v49 = vunpack.c.l.b16 %v20
    %v50 = vpack.c.b16 %v46, %v45
    %v51 = vpack.c.b16 %v48, %v47
    %v52 = vpack.c.b16 %v49, %v49
    %v65 = vunpack.c.l.b16 %v21
    %v66 = vunpack.c.l.b16 %v22
    %v67 = vunpack.c.l.b16 %v23
    %v68 = vunpack.c.l.b16 %v24
    %v69 = vunpack.c.l.b16 %v25
    %v70 = vunpack.c.l.b16 %v26
    %v71 = vunpack.c.l.b16 %v27
    %v72 = vunpack.c.l.b16 %v28
    %v73 = vunpack.c.l.b16 %v29
    %v74 = vunpack.c.l.b16 %v30
    %v75 = vunpack.c.l.b16 %v31
    %v76 = vunpack.c.l.b16 %v32
    %v77 = vpack.c.b16 %v66, %v65
    %v78 = vpack.c.b16 %v68, %v67
    %v79 = vpack.c.b16 %v70, %v69
    %v80 = vpack.c.b16 %v72, %v71
    %v81 = vpack.c.b16 %v74, %v73
    %v82 = vpack.c.b16 %v76, %v75
    %vm88 = vcmask 744448
    %v90 = vsel %vm88, %v50, 0
    %v93 = vsel %vm88, %v51, 0
    %v96 = vsel %vm88, %v52, 0
    %vm98 = vcmask 1044480
    %vm99 = vcmask 1045504
    %v100 = vsel %vm98, 4294967295, 65535
    %v101 = vsel %vm99, %v100, 0
    %v103 = vand.u32 %v82, %v101
    %105 = vmatprep.subr.bf16.mxu0 0
    %106 = vmatpush1.bf16.msra.mxu0 0
    %107 = vmatprep.subr.bf16.mxu0 0
    %108 = vmatpush1.bf16.msra.mxu0 0
    %109 = vmatprep.subr.bf16.mxu0 0
    %110 = vmatpush1.bf16.msra.mxu0 %v103
    %111 = vmatprep.subr.bf16.mxu0 0
    %112 = vmatpush1.bf16.msra.mxu0 %v81
    %113 = vmatprep.subr.bf16.mxu0 0
    %114 = vmatpush1.bf16.msra.mxu0 %v80
    %115 = vmatprep.subr.bf16.mxu0 0
    %116 = vmatpush1.bf16.msra.mxu0 %v79
    %117 = vmatprep.subr.bf16.mxu0 0
    %118 = vmatpush1.bf16.msra.mxu0 %v78
    %119 = vmatprep.subr.bf16.mxu0 0
    %120 = vmatpush1.bf16.msra.mxu0 %v77
    %121 = vmatprep.subr.bf16.mxu0 0
    %122 = vmatpush2.bf16.msra.mxu0 0
    %123 = vmatprep.subr.bf16.mxu0 0
    %124 = vmatpush2.bf16.msra.mxu0 0
    %125 = vmatprep.subr.bf16.mxu0 0
    %126 = vmatpush2.bf16.msra.mxu0 0
    %127 = vmatprep.subr.bf16.mxu0 0
    %128 = vmatpush2.bf16.msra.mxu0 0
    %129 = vmatprep.subr.bf16.mxu0 0
    %130 = vmatpush2.bf16.msra.mxu0 0
    %131 = vmatprep.subr.bf16.mxu0 0
    %132 = vmatpush2.bf16.msra.mxu0 0
    %133 = vmatprep.subr.bf16.mxu0 0
    %134 = vmatpush2.bf16.msra.mxu0 0
    %135 = vmatprep.subr.bf16.mxu0 0
    %136 = vmatpush2.bf16.msra.mxu0 0
    %137 = vmatprep.mubr.bf16.mxu0 0
    %138 = vmatmul.mubr.bf16.gmra.mxu0 %v90
    %v139 = vpop.f32.mrf.mxu0
    %v140 = vadd.f32 %v38, %v139
    %v141 = vpop.f32.mrf.mxu0
    %v142 = vpop.f32.mrf.mxu0
    %v143 = vadd.f32 %v38, %v142
    %v144 = vpop.f32.mrf.mxu0
    %145 = vmatprep.mubr.bf16.mxu0 0
    %146 = vmatmul.mubr.bf16.gmra.mxu0 %v93
    %v147 = vpop.f32.mrf.mxu0
    %v148 = vadd.f32 %v38, %v147
    %v149 = vpop.f32.mrf.mxu0
    %v150 = vpop.f32.mrf.mxu0
    %v151 = vadd.f32 %v38, %v150
    %v152 = vpop.f32.mrf.mxu0
    %153 = vmatprep.mubr.bf16.mxu0 0
    %154 = vmatmul.mubr.bf16.gmra.mxu0 %v96
    %v155 = vpop.f32.mrf.mxu0
    %v156 = vadd.f32 %v38, %v155
    %v157 = vpop.f32.mrf.mxu0
    %v158 = vpop.f32.mrf.mxu0
    %v159 = vpop.f32.mrf.mxu0
    %160 = vdwg.mxu0
    %v161 = vmax.f32 %v140, 0.0
    %v162 = vmax.f32 %v143, 0.0
    %v163 = vmax.f32 %v148, 0.0
    %v164 = vmax.f32 %v151, 0.0
    %v165 = vmax.f32 %v156, 0.0
    %vm166 = vcmask 367616
    %167 = vst.msk [vmem:[#allocation2] sm:$0xff] %vm166, %v161
    %168 = vst.msk [vmem:[#allocation2 + $0x8] sm:$0xff] %vm166, %v162
    %169 = vst.msk [vmem:[#allocation2 + $0x10] sm:$0xff] %vm166, %v163
    %170 = vst.msk [vmem:[#allocation2 + $0x18] sm:$0xff] %vm166, %v164
    %171 = vst.msk [vmem:[#allocation2 + $0x20] sm:$0xff] %vm166, %v165
    // Predicated region
    $region14: #{tpu_custom_call.1} parent=1 // pred_check
      _
    $region15: #{tpu_custom_call.1} parent=1 // pred_check_branch
      %173 = sbr.rel (0) target = $region17
    $region16: #{tpu_custom_call.1} parent=1 // pred_region
      %s175 = ssub.s32 640, 640
      %176 = vsyncadd [#allocation3], %s175
      %s177 = sshll.u32 [#allocation2], 4
      %s178 = int_to_ptr.vmem [resolvable:$true] %s177
      %183 = dma.vmem_to_hbm [thread:$0]  %s178, 640, %s3, [#allocation3], 128, 128, 8
    $region17: #{tpu_custom_call.1} parent=1 // pred_fallthru
      _
    // Predicated region
    $region18: #{tpu_custom_call.1} parent=1 // pred_check
      _
    $region19: #{tpu_custom_call.1} parent=1 // pred_check_branch
      %185 = sbr.rel (0) target = $region21
    $region20: #{tpu_custom_call.1} parent=1 // pred_region
      %186 = dma.done [#allocation3], 640
    $region21: #{tpu_custom_call.1} parent=1 // pred_fallthru
      _
    %187 = vsyncpa [#allocation3], 1

</llo_original>
